<compile_context>
chip_gen: v6e
topology: v6e:2x2x1
jax: 0.10.0
libtpu: 0.0.40
codegen_flags: <defaults>
</compile_context>

<pallas_src>
import functools

import jax
import jax.numpy as jnp
from jax import lax
from jax.experimental import pallas as pl
from jax.experimental.pallas import tpu as pltpu


def _round_up(n, m):
    return ((n + m - 1) // m) * m


def _kd_kernel(x_ref, idx_ref,
               w1_ref, w2_ref, wp_ref,
               cwc_ref, bc_ref, bp_ref,
               o_ref, *, fold, num_img):
    cdt = w1_ref.dtype                       # matmul input dtype (bf16 or f32)
    x = x_ref[...]                           # [TBP, fold*D]  (packed rows)
    tbp, fD = x.shape

    # --- chrono-view path: one_hot(img_idx) @ (table @ [w1c | w2c]) + [b1|b2]
    # oh[i, g*NI + p] == 1  iff  img_idx of logical row (fold*i + g) == p
    j = lax.broadcasted_iota(jnp.int32, (tbp, fold * num_img), 1)
    pos = j
    tgt = idx_ref[:, 0:1]
    for g in range(1, fold):                 # fold is a small static int
        seg = j >= g * num_img
        pos = jnp.where(seg, j - g * num_img, pos)
        tgt = jnp.where(seg, idx_ref[:, g:g + 1], tgt)
    oh = (pos == tgt).astype(cdt)            # [TBP, fold*NI]
    cvb = (jnp.dot(oh, cwc_ref[...], preferred_element_type=jnp.float32)
           + bc_ref[...])                    # [TBP, 2*fold*D]  f32

    # --- main path (block-diagonal weights act independently per logical row)
    h = jnp.maximum(x, 0.0)                                          # relu(x)
    h = (jnp.dot(h.astype(cdt), w1_ref[...],
                 preferred_element_type=jnp.float32) + cvb[:, :fD])  # linear1
    h = jnp.maximum(h, 0.0)
    h = (jnp.dot(h.astype(cdt), w2_ref[...],
                 preferred_element_type=jnp.float32) + cvb[:, fD:])  # linear2
    h = jnp.maximum(h, 0.0)
    h = h + x                                # res_momentum=True (pre-relu x)
    o_ref[...] = (jnp.dot(h.astype(cdt), wp_ref[...],
                          preferred_element_type=jnp.float32)
                  + bp_ref[...]).astype(o_ref.dtype)                 # proj


def kernel_derivative_forward(t, x, img_idx, params, *, tb=2048,
                              use_bf16=True, out_dtype=None):
    """Pallas implementation of KernelDerivative.forward
    (chrono_view=True, res_momentum=True).  `tb` = logical rows per grid step."""
    B, D = x.shape
    out_dtype = x.dtype if out_dtype is None else out_dtype

    # t must be concrete (same constraint as the PyTorch module).
    table = params["chrono_view_embed"][int(t)]           # [NI, CV] f32
    NI = table.shape[0]

    w1, b1 = params["w1"], params["b1"]      # [D+CV, D], [1, D]
    w2, b2 = params["w2"], params["b2"]      # [D+CV, D], [1, D]
    wp, bp = params["wp"], params["bp"]      # [D, D],    [1, D]

    # Pack `fold` logical rows per physical row so the kernel sees dense
    # 128-lane arrays (fold=2 for D=64).  Free row-major reshapes; fold=1
    # fallback when B doesn't divide (e.g. odd B).
    fold = 1
    if D <= 128 and 128 % D == 0:
        cand = 128 // D
        if cand > 1 and B % cand == 0:
            fold = cand
    fD = fold * D
    B_p = B // fold

    mm_dtype = jnp.bfloat16 if use_bf16 else jnp.float32
    eye = jnp.eye(fold, dtype=jnp.float32)
    hi = jax.lax.Precision.HIGHEST
    w1bd = jnp.kron(eye, w1[:D]).astype(mm_dtype)          # [fD, fD]
    w2bd = jnp.kron(eye, w2[:D]).astype(mm_dtype)          # [fD, fD]
    wpbd = jnp.kron(eye, wp).astype(mm_dtype)              # [fD, fD]
    cwc1 = jnp.dot(table, w1[D:], precision=hi)            # [NI, D]  table@w1c
    cwc2 = jnp.dot(table, w2[D:], precision=hi)            # [NI, D]  table@w2c
    cwc = jnp.concatenate([jnp.kron(eye, cwc1),
                           jnp.kron(eye, cwc2)],
                          axis=1).astype(mm_dtype)          # [fold*NI, 2*fD]
    bc = jnp.concatenate([jnp.tile(b1, (1, fold)),
                          jnp.tile(b2, (1, fold))],
                         axis=1).astype(jnp.float32)        # [1, 2*fD]
    bpp = jnp.tile(bp, (1, fold)).astype(jnp.float32)       # [1, fD]

    xp = x.reshape(B_p, fD)                                  # free reshape
    idxp = img_idx.astype(jnp.int32).reshape(B_p, fold)      # free reshape

    # Tile selection: big tiles, no padding (cdiv grid handles the remainder),
    # >=2 roughly balanced steps when the batch allows (v7x megacore).
    tbp = max(8, _round_up(max(tb, 8) // fold, 8))
    half = _round_up(pl.cdiv(B_p, 2), 8)
    if half < B_p:
        tbp = min(tbp, half)
    if tbp >= B_p:
        tbp = B_p                          # single full-extent block (legal)
    grid = (pl.cdiv(B_p, tbp),)

    wbytes = jnp.dtype(mm_dtype).itemsize
    flops = 2 * B_p * (3 * fD * fD + (fold * NI) * (2 * fD))
    bytes_accessed = (B_p * fD * jnp.dtype(x.dtype).itemsize      # x in
                      + B_p * fold * 4                            # img_idx in
                      + B_p * fD * jnp.dtype(out_dtype).itemsize  # out
                      + (3 * fD * fD + fold * NI * 2 * fD) * wbytes
                      + 3 * fD * 4)                               # biases

    kern = functools.partial(_kd_kernel, fold=fold, num_img=NI)
    full = lambda i: (0, 0)
    out = pl.pallas_call(
        kern,
        out_shape=jax.ShapeDtypeStruct((B_p, fD), out_dtype),
        grid_spec=pltpu.PrefetchScalarGridSpec(
            num_scalar_prefetch=0,
            grid=grid,
            in_specs=[
                pl.BlockSpec((tbp, fD), lambda i: (i, 0)),        # x (packed)
                pl.BlockSpec((tbp, fold), lambda i: (i, 0)),      # img_idx
                pl.BlockSpec((fD, fD), full),                     # w1 blockdiag
                pl.BlockSpec((fD, fD), full),                     # w2 blockdiag
                pl.BlockSpec((fD, fD), full),                     # wp blockdiag
                pl.BlockSpec((fold * NI, 2 * fD), full),          # table@[w1c|w2c]
                pl.BlockSpec((1, 2 * fD), full),                  # [b1|b2] packed
                pl.BlockSpec((1, fD), full),                      # bp packed
            ],
            out_specs=pl.BlockSpec((tbp, fD), lambda i: (i, 0)),
        ),
        compiler_params=pltpu.CompilerParams(
            dimension_semantics=("parallel",)),
        cost_estimate=pl.CostEstimate(flops=flops, transcendentals=0,
                                      bytes_accessed=bytes_accessed),
    )(xp, idxp, w1bd, w2bd, wpbd, cwc, bc, bpp)
    return out.reshape(B, D)


def _reference_forward(t, x, img_idx, params):
    """Plain-JAX reference mirroring the PyTorch module."""
    cv = params["chrono_view_embed"][int(t)][img_idx.astype(jnp.int32)]
    res = x
    h = jax.nn.relu(x)
    h = jnp.concatenate([h, cv], axis=-1) @ params["w1"] + params["b1"]
    h = jax.nn.relu(h)
    h = jnp.concatenate([h, cv], axis=-1) @ params["w2"] + params["b2"]
    h = jax.nn.relu(h)
    return (h + res) @ params["wp"] + params["bp"]


def _init_params(key, num_rays=9, embed_dim=64, chrono_view_embed_dim=16,
                 num_img=29):
    """Deterministic synthetic params (shapes match the torch module).
    Weights stored as [in, out] (torch weight transposed)."""
    D, CV = embed_dim, chrono_view_embed_dim
    ks = jax.random.split(key, 7)
    scale = 0.1
    return {
        # torch init is zeros; small randoms so the gather path is exercised.
        "chrono_view_embed": scale * jax.random.normal(
            ks[0], (num_rays, num_img, CV), jnp.float32),
        "w1": scale * jax.random.normal(ks[1], (D + CV, D), jnp.float32),
        "b1": scale * jax.random.normal(ks[2], (1, D), jnp.float32),
        "w2": scale * jax.random.normal(ks[3], (D + CV, D), jnp.float32),
        "b2": scale * jax.random.normal(ks[4], (1, D), jnp.float32),
        "wp": scale * jax.random.normal(ks[5], (D, D), jnp.float32),
        "bp": scale * jax.random.normal(ks[6], (1, D), jnp.float32),
    }


if __name__ == "__main__":
    key = jax.random.PRNGKey(0)
    k_par, k_x, k_idx = jax.random.split(key, 3)

    B, D = 200, 64                 # B even (fold=2) but not tile-divisible
    NUM_RAYS, NUM_IMG, CV = 9, 29, 16
    t = 3

    params = _init_params(k_par, num_rays=NUM_RAYS, embed_dim=D,
                          chrono_view_embed_dim=CV, num_img=NUM_IMG)
    x = jax.random.normal(k_x, (B, D), jnp.float32)
    img_idx = jax.random.randint(k_idx, (B,), 0, NUM_IMG, dtype=jnp.int32)

    ref = _reference_forward(t, x, img_idx, params)

    # 1) f32 MXU path, small tile -> multi-step grid with a partial boundary
    #    block, packed (fold=2) layout, in-kernel one-hot gather.
    out_f32 = kernel_derivative_forward(t, x, img_idx, params,
                                        tb=64, use_bf16=False)
    out_f32 = jax.block_until_ready(out_f32)
    assert out_f32.shape == (B, D)
    assert jnp.allclose(out_f32, ref, atol=3e-4, rtol=3e-4), "f32 mismatch"

    # 2) odd batch -> fold=1 fallback path (also f32, partial boundary block).
    Bo = 57
    xo, io = x[:Bo], img_idx[:Bo]
    ref_o = _reference_forward(t, xo, io, params)
    out_o = kernel_derivative_forward(t, xo, io, params, tb=16, use_bf16=False)
    out_o = jax.block_until_ready(out_o)
    assert out_o.shape == (Bo, D)
    assert jnp.allclose(out_o, ref_o, atol=3e-4, rtol=3e-4), "fold=1 mismatch"

    # 3) default production path (bf16 MXU inputs, tb=2048, fold=2,
    #    2-step clamp for v7x) -> looser tolerance.
    out_bf16 = kernel_derivative_forward(t, x, img_idx, params)
    out_bf16 = jax.block_until_ready(out_bf16)
    assert out_bf16.shape == (B, D)
    assert jnp.allclose(out_bf16, ref, atol=3e-2, rtol=3e-2), "bf16 mismatch"

    print("KERNEL_OK")
</pallas_src>

<mosaic_0001>
module attributes {stable_mosaic.version = 11 : i64} {
  func.func @_kd_kernel(%arg0: i32, %arg1: memref<32x128xf32, #tpu.memory_space<vmem>>, %arg2: memref<32x2xi32, #tpu.memory_space<vmem>>, %arg3: memref<128x128xf32, #tpu.memory_space<vmem>>, %arg4: memref<128x128xf32, #tpu.memory_space<vmem>>, %arg5: memref<128x128xf32, #tpu.memory_space<vmem>>, %arg6: memref<58x256xf32, #tpu.memory_space<vmem>>, %arg7: memref<1x256xf32, #tpu.memory_space<vmem>>, %arg8: memref<1x128xf32, #tpu.memory_space<vmem>>, %arg9: memref<32x128xf32, #tpu.memory_space<vmem>>) attributes {dimension_semantics = [#tpu.dimension_semantics<parallel>], iteration_bounds = array<i64: 4>, scalar_prefetch = 0 : i64, scratch_operands = 0 : i64, tpu.core_type = #tpu.core_type<tc>, window_params = [{transform_indices = @transform_0, window_bounds = array<i64: 32, 128>}, {transform_indices = @transform_1, window_bounds = array<i64: 32, 2>}, {pipeline_mode = #tpu.pipeline_mode<synchronous>, transform_indices = @transform_2, window_bounds = array<i64: 128, 128>}, {pipeline_mode = #tpu.pipeline_mode<synchronous>, transform_indices = @transform_3, window_bounds = array<i64: 128, 128>}, {pipeline_mode = #tpu.pipeline_mode<synchronous>, transform_indices = @transform_4, window_bounds = array<i64: 128, 128>}, {pipeline_mode = #tpu.pipeline_mode<synchronous>, transform_indices = @transform_5, window_bounds = array<i64: 58, 256>}, {pipeline_mode = #tpu.pipeline_mode<synchronous>, transform_indices = @transform_6, window_bounds = array<i64: 1, 256>}, {pipeline_mode = #tpu.pipeline_mode<synchronous>, transform_indices = @transform_7, window_bounds = array<i64: 1, 128>}, {transform_indices = @transform_8, window_bounds = array<i64: 32, 128>}]} {
    %c0 = arith.constant 0 : index
    %c0_0 = arith.constant 0 : index
    %0 = vector.load %arg1[%c0, %c0_0] : memref<32x128xf32, #tpu.memory_space<vmem>>, vector<32x128xf32>
    %1 = tpu.iota {dimensions = array<i32: 1>} : vector<32x58xi32>
    %c0_1 = arith.constant 0 : index
    %c0_2 = arith.constant 0 : index
    %2 = vector.load %arg2[%c0_1, %c0_2] : memref<32x2xi32, #tpu.memory_space<vmem>>, vector<32x1xi32>
    %c29_i32 = arith.constant 29 : i32
    %3 = vector.broadcast %c29_i32 : i32 to vector<32x58xi32>
    %4 = arith.cmpi sge, %1, %3 : vector<32x58xi32>
    %c29_i32_3 = arith.constant 29 : i32
    %5 = vector.broadcast %c29_i32_3 : i32 to vector<32x58xi32>
    %6 = arith.subi %1, %5 : vector<32x58xi32>
    %7 = arith.select %4, %6, %1 : vector<32x58xi1>, vector<32x58xi32>
    %c0_4 = arith.constant 0 : index
    %c1 = arith.constant 1 : index
    %8 = vector.load %arg2[%c0_4, %c1] : memref<32x2xi32, #tpu.memory_space<vmem>>, vector<32x1xi32>
    %9 = vector.shape_cast %8 : vector<32x1xi32> to vector<32x1xi32>
    %10 = vector.broadcast %9 : vector<32x1xi32> to vector<32x58xi32>
    %11 = vector.shape_cast %2 : vector<32x1xi32> to vector<32x1xi32>
    %12 = vector.broadcast %11 : vector<32x1xi32> to vector<32x58xi32>
    %13 = arith.select %4, %10, %12 : vector<32x58xi1>, vector<32x58xi32>
    %14 = arith.cmpi eq, %7, %13 : vector<32x58xi32>
    %15 = arith.extui %14 : vector<32x58xi1> to vector<32x58xi32>
    %16 = arith.sitofp %15 : vector<32x58xi32> to vector<32x58xf32>
    %c0_5 = arith.constant 0 : index
    %c0_6 = arith.constant 0 : index
    %17 = vector.load %arg6[%c0_5, %c0_6] : memref<58x256xf32, #tpu.memory_space<vmem>>, vector<58x256xf32>
    %cst = arith.constant dense<0.000000e+00> : vector<32x256xf32>
    %18 = tpu.matmul %16, %17, %cst {dimension_numbers = #tpu.dot_dimension_numbers<[1], [0], [0], [1], [0, 0, 1, 1], [], []>} : vector<32x58xf32>, vector<58x256xf32>, vector<32x256xf32> -> vector<32x256xf32>
    %c0_7 = arith.constant 0 : index
    %c0_8 = arith.constant 0 : index
    %19 = vector.load %arg7[%c0_7, %c0_8] : memref<1x256xf32, #tpu.memory_space<vmem>>, vector<1x256xf32>
    %20 = vector.broadcast %19 : vector<1x256xf32> to vector<32x256xf32>
    %21 = arith.addf %18, %20 : vector<32x256xf32>
    %cst_9 = arith.constant 0.000000e+00 : f32
    %22 = vector.broadcast %cst_9 : f32 to vector<32x128xf32>
    %23 = arith.maximumf %0, %22 : vector<32x128xf32>
    %c0_10 = arith.constant 0 : index
    %c0_11 = arith.constant 0 : index
    %24 = vector.load %arg3[%c0_10, %c0_11] : memref<128x128xf32, #tpu.memory_space<vmem>>, vector<128x128xf32>
    %cst_12 = arith.constant dense<0.000000e+00> : vector<32x128xf32>
    %25 = tpu.matmul %23, %24, %cst_12 {dimension_numbers = #tpu.dot_dimension_numbers<[1], [0], [0], [1], [0, 0, 1, 1], [], []>} : vector<32x128xf32>, vector<128x128xf32>, vector<32x128xf32> -> vector<32x128xf32>
    %26 = vector.extract_strided_slice %21 {offsets = [0, 0], sizes = [32, 128], strides = [1, 1]} : vector<32x256xf32> to vector<32x128xf32>
    %27 = arith.addf %25, %26 : vector<32x128xf32>
    %cst_13 = arith.constant 0.000000e+00 : f32
    %28 = vector.broadcast %cst_13 : f32 to vector<32x128xf32>
    %29 = arith.maximumf %27, %28 : vector<32x128xf32>
    %c0_14 = arith.constant 0 : index
    %c0_15 = arith.constant 0 : index
    %30 = vector.load %arg4[%c0_14, %c0_15] : memref<128x128xf32, #tpu.memory_space<vmem>>, vector<128x128xf32>
    %cst_16 = arith.constant dense<0.000000e+00> : vector<32x128xf32>
    %31 = tpu.matmul %29, %30, %cst_16 {dimension_numbers = #tpu.dot_dimension_numbers<[1], [0], [0], [1], [0, 0, 1, 1], [], []>} : vector<32x128xf32>, vector<128x128xf32>, vector<32x128xf32> -> vector<32x128xf32>
    %32 = vector.extract_strided_slice %21 {offsets = [0, 128], sizes = [32, 128], strides = [1, 1]} : vector<32x256xf32> to vector<32x128xf32>
    %33 = arith.addf %31, %32 : vector<32x128xf32>
    %cst_17 = arith.constant 0.000000e+00 : f32
    %34 = vector.broadcast %cst_17 : f32 to vector<32x128xf32>
    %35 = arith.maximumf %33, %34 : vector<32x128xf32>
    %36 = arith.addf %35, %0 : vector<32x128xf32>
    %c0_18 = arith.constant 0 : index
    %c0_19 = arith.constant 0 : index
    %37 = vector.load %arg5[%c0_18, %c0_19] : memref<128x128xf32, #tpu.memory_space<vmem>>, vector<128x128xf32>
    %cst_20 = arith.constant dense<0.000000e+00> : vector<32x128xf32>
    %38 = tpu.matmul %36, %37, %cst_20 {dimension_numbers = #tpu.dot_dimension_numbers<[1], [0], [0], [1], [0, 0, 1, 1], [], []>} : vector<32x128xf32>, vector<128x128xf32>, vector<32x128xf32> -> vector<32x128xf32>
    %c0_21 = arith.constant 0 : index
    %c0_22 = arith.constant 0 : index
    %39 = vector.load %arg8[%c0_21, %c0_22] : memref<1x128xf32, #tpu.memory_space<vmem>>, vector<1x128xf32>
    %40 = vector.broadcast %39 : vector<1x128xf32> to vector<32x128xf32>
    %41 = arith.addf %38, %40 : vector<32x128xf32>
    %c0_23 = arith.constant 0 : index
    %c0_24 = arith.constant 0 : index
    %42 = vector.load %arg9[%c0_23, %c0_24] : memref<32x128xf32, #tpu.memory_space<vmem>>, vector<32x128xf32>
    tpu.vector_store %arg9[%c0_23, %c0_24], %41 {strides = array<i32>} : memref<32x128xf32, #tpu.memory_space<vmem>>, vector<32x128xf32>,
    return
  }
  func.func @transform_0(%arg0: i32) -> (i32, i32) {
    %c0_i32 = arith.constant 0 : i32
    %c0_i32_0 = arith.constant 0 : i32
    return %arg0, %c0_i32 : i32, i32
  }
  func.func @transform_1(%arg0: i32) -> (i32, i32) {
    %c0_i32 = arith.constant 0 : i32
    %c0_i32_0 = arith.constant 0 : i32
    return %arg0, %c0_i32 : i32, i32
  }
  func.func @transform_2(%arg0: i32) -> (i32, i32) {
    %c0_i32 = arith.constant 0 : i32
    %c0_i32_0 = arith.constant 0 : i32
    %c0_i32_1 = arith.constant 0 : i32
    return %c0_i32, %c0_i32_0 : i32, i32
  }
  func.func @transform_3(%arg0: i32) -> (i32, i32) {
    %c0_i32 = arith.constant 0 : i32
    %c0_i32_0 = arith.constant 0 : i32
    %c0_i32_1 = arith.constant 0 : i32
    return %c0_i32, %c0_i32_0 : i32, i32
  }
  func.func @transform_4(%arg0: i32) -> (i32, i32) {
    %c0_i32 = arith.constant 0 : i32
    %c0_i32_0 = arith.constant 0 : i32
    %c0_i32_1 = arith.constant 0 : i32
    return %c0_i32, %c0_i32_0 : i32, i32
  }
  func.func @transform_5(%arg0: i32) -> (i32, i32) {
    %c0_i32 = arith.constant 0 : i32
    %c0_i32_0 = arith.constant 0 : i32
    %c0_i32_1 = arith.constant 0 : i32
    return %c0_i32, %c0_i32_0 : i32, i32
  }
  func.func @transform_6(%arg0: i32) -> (i32, i32) {
    %c0_i32 = arith.constant 0 : i32
    %c0_i32_0 = arith.constant 0 : i32
    %c0_i32_1 = arith.constant 0 : i32
    return %c0_i32, %c0_i32_0 : i32, i32
  }
  func.func @transform_7(%arg0: i32) -> (i32, i32) {
    %c0_i32 = arith.constant 0 : i32
    %c0_i32_0 = arith.constant 0 : i32
    %c0_i32_1 = arith.constant 0 : i32
    return %c0_i32, %c0_i32_0 : i32, i32
  }
  func.func @transform_8(%arg0: i32) -> (i32, i32) {
    %c0_i32 = arith.constant 0 : i32
    %c0_i32_0 = arith.constant 0 : i32
    return %arg0, %c0_i32 : i32, i32
  }
}

</mosaic_0001>

<llo_original>
// kernel: tpu_custom_call.1
$region0: #{tpu_custom_call.1}
  #allocation0 [shape = 'u32[]', space=smem, size = 0x4, offset = 0x4, fixed_abs, tag = 'smem constant byte address 0x4 - core index']
  #allocation1 [shape = 'u32[144,128]{1,0:T(1,128)}', space=vmem, size = 0x12000, scoped, tag = 'internal scratch']
  %s0 = inlined_call_operand.vmem [shape: f32[100,128], index: 0, kind: input, shape index: {}]
  %s1 = inlined_call_operand.vmem [shape: s32[100,2], index: 1, kind: input, shape index: {}]
  %s2 = inlined_call_operand.hbm [shape: f32[128,128], index: 2, kind: input, shape index: {}]
  %s3 = inlined_call_operand.hbm [shape: f32[128,128], index: 3, kind: input, shape index: {}]
  %s4 = inlined_call_operand.hbm [shape: f32[128,128], index: 4, kind: input, shape index: {}]
  %s5 = inlined_call_operand.hbm [shape: f32[58,256], index: 5, kind: input, shape index: {}]
  %s6 = inlined_call_operand.vmem [shape: f32[1,256], index: 6, kind: input, shape index: {}]
  %s7 = inlined_call_operand.vmem [shape: f32[1,128], index: 7, kind: input, shape index: {}]
  %s8 = inlined_call_operand.hbm [shape: f32[100,128], index: 8, kind: output, shape index: {}]
  %s9 = sld [smem:[#allocation0]]
  $region81: #{tpu_custom_call.1} parent=0
    _
  %s11 = ssub.s32 1, %s9
  %s12 = scalar_select 0, %s11, %s9
  $region1: #{tpu_custom_call.1} parent=0
    #allocation2 [shape = 'u8[65536]{0}', space=vmem, size = 0x10000, scoped, tag = 'input window, operand 2, single buffered']
    #allocation3 [shape = 's32[2]{0}', space=sflag, size = 0x8, scoped, tag = 'scoped memory for tpu_custom_call.1']
    #allocation4 [shape = 's32[2]{0}', space=sflag, size = 0x8, scoped, tag = 'scoped memory for tpu_custom_call.1']
    #allocation5 [shape = 'u8[65536]{0}', space=vmem, size = 0x10000, scoped, tag = 'input window, operand 3, single buffered']
    #allocation6 [shape = 's32[1]{0}', space=sflag, size = 0x4, scoped, tag = 'scoped memory for tpu_custom_call.1']
    #allocation7 [shape = 'u8[65536]{0}', space=vmem, size = 0x10000, scoped, tag = 'input window, operand 4, single buffered']
    #allocation8 [shape = 'u8[65536]{0}', space=vmem, size = 0x10000, scoped, tag = 'input window, operand 5, single buffered']
    #allocation9 [shape = 's32[1]{0}', space=sflag, size = 0x4, scoped, tag = 'scoped memory for tpu_custom_call.1']
    #allocation10 [shape = 'u8[32768]{0}', space=vmem, size = 0x8000, scoped, tag = 'output window, operand 0']
    %13 = vsyncpa [#allocation3], 0
    %14 = vsyncpa [#allocation6], 0
    %15 = vsyncpa [#allocation9], 0
    %16 = vsyncpa [#allocation4], 0
    %s17 = scalar_lea.sflag [#allocation4], 1
    %18 = vsyncpa %s17, 0
    loop: start=0, step=1, limit=6
    $region2: #{tpu_custom_call.1} parent=1 // loop_pre_header
      _
    $region3: #{tpu_custom_call.1} parent=1 // loop_header
      %s20 = sphi 0, %s24
      %p21 = scmp.ge.s32.totalorder %s20, 6
      %s30 = sphi 0, %s32
      %s33 = sphi 0, %s30
      %s34 = sphi 0, %s33
      %s50 = sphi 0, %s34
      %s56 = sphi 0, %s58
      %s59 = sphi 0, %s56
      %s60 = sphi 0, %s59
      %s76 = sphi 0, %s60
      %s80 = sphi 0, %s80
      %s82 = sphi 0, %s80
      %s83 = sphi 0, %s82
      %s97 = sphi 0, %s83
      %s101 = sphi 0, %s101
      %s103 = sphi 0, %s101
      %s104 = sphi 0, %s103
      %s118 = sphi 0, %s104
      %s122 = sphi 0, %s122
      %s124 = sphi 0, %s122
      %s125 = sphi 0, %s124
      %s139 = sphi 0, %s125
      %s143 = sphi 0, %s143
      %s145 = sphi 0, %s143
      %s146 = sphi 0, %s145
      %s160 = sphi 0, %s146
      %s164 = sphi 0, %s164
      %s166 = sphi 0, %s164
      %s167 = sphi 0, %s166
      %s181 = sphi 0, %s167
      %s185 = sphi 0, %s185
      %s187 = sphi 0, %s185
      %s188 = sphi 0, %s187
      %s202 = sphi 0, %s188
      %s208 = sphi 0, %s210
      %s211 = sphi 0, %s208
      %s212 = sphi 0, %s211
      %s228 = sphi 0, %s212
    $region4: #{tpu_custom_call.1} parent=1 // loop_header_branch
      %23 = sbr.rel (%p21) target = $region8
    $region5: #{tpu_custom_call.1} parent=1 // loop_body
      %s25 = ssub.s32 %s20, 1
      %s26 = ssub.s32 %s20, 2
      %s27 = sadd.s32 %s20, 1
      %s28 = ssub.s32 %s20, %s27
      %p29 = scmp.eq.s32.totalorder %s28, 0
      %s31 = sadd.s32 %s30, 1
      %s32 = scalar_select %p29, %s30, %s31
      %p35 = pneg %p29
      %p36 = scmp.eq.s32.totalorder %s20, 3
      %p37 = por %p35, %p36
      %p38 = scmp.ne.s32.totalorder %s30, %s33
      %p39 = scmp.eq.s32.totalorder %s20, 0
      %p40 = por %p38, %p39
      %p41 = scmp.ne.s32.totalorder %s30, %s33
      %p42 = scmp.eq.s32.totalorder %s25, 3
      %p43 = por %p41, %p42
      %p44 = scmp.ne.s32.totalorder %s33, %s34
      %p45 = scmp.eq.s32.totalorder %s25, 0
      %p46 = por %p44, %p45
      %p47 = scmp.ne.s32.totalorder %s33, %s34
      %p48 = scmp.eq.s32.totalorder %s26, 3
      %p49 = por %p47, %p48
      %p51 = scmp.ne.s32.totalorder %s34, %s50
      %p52 = scmp.eq.s32.totalorder %s26, 0
      %p53 = por %p51, %p52
      %s54 = ssub.s32 %s20, %s27
      %p55 = scmp.eq.s32.totalorder %s54, 0
      %s57 = sadd.s32 %s56, 1
      %s58 = scalar_select %p55, %s56, %s57
      %p61 = pneg %p55
      %p62 = scmp.eq.s32.totalorder %s20, 3
      %p63 = por %p61, %p62
      %p64 = scmp.ne.s32.totalorder %s56, %s59
      %p65 = scmp.eq.s32.totalorder %s20, 0
      %p66 = por %p64, %p65
      %p67 = scmp.ne.s32.totalorder %s56, %s59
      %p68 = scmp.eq.s32.totalorder %s25, 3
      %p69 = por %p67, %p68
      %p70 = scmp.ne.s32.totalorder %s59, %s60
      %p71 = scmp.eq.s32.totalorder %s25, 0
      %p72 = por %p70, %p71
      %p73 = scmp.ne.s32.totalorder %s59, %s60
      %p74 = scmp.eq.s32.totalorder %s26, 3
      %p75 = por %p73, %p74
      %p77 = scmp.ne.s32.totalorder %s60, %s76
      %p78 = scmp.eq.s32.totalorder %s26, 0
      %p79 = por %p77, %p78
      %s81 = sadd.s32 %s80, 1
      %p84 = scmp.eq.s32.totalorder %s20, 3
      %p85 = scmp.ne.s32.totalorder %s80, %s82
      %p86 = scmp.eq.s32.totalorder %s20, 0
      %p87 = por %p85, %p86
      %p88 = scmp.ne.s32.totalorder %s80, %s82
      %p89 = scmp.eq.s32.totalorder %s25, 3
      %p90 = por %p88, %p89
      %p91 = scmp.ne.s32.totalorder %s82, %s83
      %p92 = scmp.eq.s32.totalorder %s25, 0
      %p93 = por %p91, %p92
      %p94 = scmp.ne.s32.totalorder %s82, %s83
      %p95 = scmp.eq.s32.totalorder %s26, 3
      %p96 = por %p94, %p95
      %p98 = scmp.ne.s32.totalorder %s83, %s97
      %p99 = scmp.eq.s32.totalorder %s26, 0
      %p100 = por %p98, %p99
      %s102 = sadd.s32 %s101, 1
      %p105 = scmp.eq.s32.totalorder %s20, 3
      %p106 = scmp.ne.s32.totalorder %s101, %s103
      %p107 = scmp.eq.s32.totalorder %s20, 0
      %p108 = por %p106, %p107
      %p109 = scmp.ne.s32.totalorder %s101, %s103
      %p110 = scmp.eq.s32.totalorder %s25, 3
      %p111 = por %p109, %p110
      %p112 = scmp.ne.s32.totalorder %s103, %s104
      %p113 = scmp.eq.s32.totalorder %s25, 0
      %p114 = por %p112, %p113
      %p115 = scmp.ne.s32.totalorder %s103, %s104
      %p116 = scmp.eq.s32.totalorder %s26, 3
      %p117 = por %p115, %p116
      %p119 = scmp.ne.s32.totalorder %s104, %s118
      %p120 = scmp.eq.s32.totalorder %s26, 0
      %p121 = por %p119, %p120
      %s123 = sadd.s32 %s122, 1
      %p126 = scmp.eq.s32.totalorder %s20, 3
      %p127 = scmp.ne.s32.totalorder %s122, %s124
      %p128 = scmp.eq.s32.totalorder %s20, 0
      %p129 = por %p127, %p128
      %p130 = scmp.ne.s32.totalorder %s122, %s124
      %p131 = scmp.eq.s32.totalorder %s25, 3
      %p132 = por %p130, %p131
      %p133 = scmp.ne.s32.totalorder %s124, %s125
      %p134 = scmp.eq.s32.totalorder %s25, 0
      %p135 = por %p133, %p134
      %p136 = scmp.ne.s32.totalorder %s124, %s125
      %p137 = scmp.eq.s32.totalorder %s26, 3
      %p138 = por %p136, %p137
      %p140 = scmp.ne.s32.totalorder %s125, %s139
      %p141 = scmp.eq.s32.totalorder %s26, 0
      %p142 = por %p140, %p141
      %s144 = sadd.s32 %s143, 1
      %p147 = scmp.eq.s32.totalorder %s20, 3
      %p148 = scmp.ne.s32.totalorder %s143, %s145
      %p149 = scmp.eq.s32.totalorder %s20, 0
      %p150 = por %p148, %p149
      %p151 = scmp.ne.s32.totalorder %s143, %s145
      %p152 = scmp.eq.s32.totalorder %s25, 3
      %p153 = por %p151, %p152
      %p154 = scmp.ne.s32.totalorder %s145, %s146
      %p155 = scmp.eq.s32.totalorder %s25, 0
      %p156 = por %p154, %p155
      %p157 = scmp.ne.s32.totalorder %s145, %s146
      %p158 = scmp.eq.s32.totalorder %s26, 3
      %p159 = por %p157, %p158
      %p161 = scmp.ne.s32.totalorder %s146, %s160
      %p162 = scmp.eq.s32.totalorder %s26, 0
      %p163 = por %p161, %p162
      %s165 = sadd.s32 %s164, 1
      %p168 = scmp.eq.s32.totalorder %s20, 3
      %p169 = scmp.ne.s32.totalorder %s164, %s166
      %p170 = scmp.eq.s32.totalorder %s20, 0
      %p171 = por %p169, %p170
      %p172 = scmp.ne.s32.totalorder %s164, %s166
      %p173 = scmp.eq.s32.totalorder %s25, 3
      %p174 = por %p172, %p173
      %p175 = scmp.ne.s32.totalorder %s166, %s167
      %p176 = scmp.eq.s32.totalorder %s25, 0
      %p177 = por %p175, %p176
      %p178 = scmp.ne.s32.totalorder %s166, %s167
      %p179 = scmp.eq.s32.totalorder %s26, 3
      %p180 = por %p178, %p179
      %p182 = scmp.ne.s32.totalorder %s167, %s181
      %p183 = scmp.eq.s32.totalorder %s26, 0
      %p184 = por %p182, %p183
      %s186 = sadd.s32 %s185, 1
      %p189 = scmp.eq.s32.totalorder %s20, 3
      %p190 = scmp.ne.s32.totalorder %s185, %s187
      %p191 = scmp.eq.s32.totalorder %s20, 0
      %p192 = por %p190, %p191
      %p193 = scmp.ne.s32.totalorder %s185, %s187
      %p194 = scmp.eq.s32.totalorder %s25, 3
      %p195 = por %p193, %p194
      %p196 = scmp.ne.s32.totalorder %s187, %s188
      %p197 = scmp.eq.s32.totalorder %s25, 0
      %p198 = por %p196, %p197
      %p199 = scmp.ne.s32.totalorder %s187, %s188
      %p200 = scmp.eq.s32.totalorder %s26, 3
      %p201 = por %p199, %p200
      %p203 = scmp.ne.s32.totalorder %s188, %s202
      %p204 = scmp.eq.s32.totalorder %s26, 0
      %p205 = por %p203, %p204
      %s206 = ssub.s32 %s20, %s27
      %p207 = scmp.eq.s32.totalorder %s206, 0
      %s209 = sadd.s32 %s208, 1
      %s210 = scalar_select %p207, %s208, %s209
      %p213 = pneg %p207
      %p214 = scmp.eq.s32.totalorder %s20, 3
      %p215 = por %p213, %p214
      %p216 = scmp.ne.s32.totalorder %s208, %s211
      %p217 = scmp.eq.s32.totalorder %s20, 0
      %p218 = por %p216, %p217
      %p219 = scmp.ne.s32.totalorder %s208, %s211
      %p220 = scmp.eq.s32.totalorder %s25, 3
      %p221 = por %p219, %p220
      %p222 = scmp.ne.s32.totalorder %s211, %s212
      %p223 = scmp.eq.s32.totalorder %s25, 0
      %p224 = por %p222, %p223
      %p225 = scmp.ne.s32.totalorder %s211, %s212
      %p226 = scmp.eq.s32.totalorder %s26, 3
      %p227 = por %p225, %p226
      %p229 = scmp.ne.s32.totalorder %s212, %s228
      %p230 = scmp.eq.s32.totalorder %s26, 0
      %p231 = por %p229, %p230
      %p232 = scmp.le.s32.totalorder 1, %s20
      %p233 = scmp.lt.s32.totalorder %s20, 5
      %p234 = pnand %p232, %p233
      %p235 = pneg %p234
      // Predicated region
      $region9: #{tpu_custom_call.1} parent=5 // pred_check
        _
      $region10: #{tpu_custom_call.1} parent=5 // pred_check_branch
        %237 = sbr.rel (%p234) target = $region12
      $region11: #{tpu_custom_call.1} parent=5 // pred_region
        %s238 = ssub.s32 %s20, 1
        // Predicated region
        $region13: #{tpu_custom_call.1} parent=11 // pred_check
          %p239 = pneg %p93
        $region14: #{tpu_custom_call.1} parent=11 // pred_check_branch
          %241 = sbr.rel (%p239) target = $region16
        $region15: #{tpu_custom_call.1} parent=11 // pred_region
          %s243 = ssub.s32 2048, 2048
          %244 = vsyncadd [#allocation3], %s243
          %s245 = sshll.u32 [#allocation2], 4
          %s246 = int_to_ptr.vmem [resolvable:$true] %s245
          %251 = dma.hbm_to_vmem [thread:$0]  %s2, 2048, %s246, [#allocation3], 128, 128, 8
        $region16: #{tpu_custom_call.1} parent=11 // pred_fallthru
          _
        // Predicated region
        $region17: #{tpu_custom_call.1} parent=11 // pred_check
          %p252 = pneg %p114
        $region18: #{tpu_custom_call.1} parent=11 // pred_check_branch
          %254 = sbr.rel (%p252) target = $region20
        $region19: #{tpu_custom_call.1} parent=11 // pred_region
          %s256 = ssub.s32 2048, 2048
          %257 = vsyncadd [#allocation6], %s256
          %s258 = sshll.u32 [#allocation5], 4
          %s259 = int_to_ptr.vmem [resolvable:$true] %s258
          %264 = dma.hbm_to_vmem [thread:$0]  %s3, 2048, %s259, [#allocation6], 128, 128, 8
        $region20: #{tpu_custom_call.1} parent=11 // pred_fallthru
          _
        // Predicated region
        $region21: #{tpu_custom_call.1} parent=11 // pred_check
          %p265 = pneg %p135
        $region22: #{tpu_custom_call.1} parent=11 // pred_check_branch
          %267 = sbr.rel (%p265) target = $region24
        $region23: #{tpu_custom_call.1} parent=11 // pred_region
          %s269 = ssub.s32 2048, 2048
          %270 = vsyncadd [#allocation6], %s269
          %s271 = sshll.u32 [#allocation7], 4
          %s272 = int_to_ptr.vmem [resolvable:$true] %s271
          %277 = dma.hbm_to_vmem [thread:$0]  %s4, 2048, %s272, [#allocation6], 128, 128, 8
        $region24: #{tpu_custom_call.1} parent=11 // pred_fallthru
          _
        // Predicated region
        $region25: #{tpu_custom_call.1} parent=11 // pred_check
          %p278 = pneg %p156
        $region26: #{tpu_custom_call.1} parent=11 // pred_check_branch
          %280 = sbr.rel (%p278) target = $region28
        $region27: #{tpu_custom_call.1} parent=11 // pred_region
          %s282 = ssub.s32 2048, 2048
          %283 = vsyncadd [#allocation9], %s282
          %s284 = sshll.u32 [#allocation8], 4
          %s285 = int_to_ptr.vmem [resolvable:$true] %s284
          %290 = dma.hbm_to_vmem [thread:$0]  %s5, 2048, %s285, [#allocation9], 256, 256, 16
        $region28: #{tpu_custom_call.1} parent=11 // pred_fallthru
          _
        // Predicated region
        $region29: #{tpu_custom_call.1} parent=11 // pred_check
          %p291 = pneg %p177
        $region30: #{tpu_custom_call.1} parent=11 // pred_check_branch
          %293 = sbr.rel (%p291) target = $region32
        $region31: #{tpu_custom_call.1} parent=11 // pred_region
          _
        $region32: #{tpu_custom_call.1} parent=11 // pred_fallthru
          _
        // Predicated region
        $region33: #{tpu_custom_call.1} parent=11 // pred_check
          %p294 = pneg %p198
        $region34: #{tpu_custom_call.1} parent=11 // pred_check_branch
          %296 = sbr.rel (%p294) target = $region36
        $region35: #{tpu_custom_call.1} parent=11 // pred_region
          _
        $region36: #{tpu_custom_call.1} parent=11 // pred_fallthru
          _
      $region12: #{tpu_custom_call.1} parent=5 // pred_fallthru
        _
      %p297 = scmp.lt.s32.totalorder %s20, 4
      // Predicated region
      $region37: #{tpu_custom_call.1} parent=5 // pred_check
        %p298 = pneg %p297
      $region38: #{tpu_custom_call.1} parent=5 // pred_check_branch
        %300 = sbr.rel (%p298) target = $region40
      $region39: #{tpu_custom_call.1} parent=5 // pred_region
        // Predicated region
        $region41: #{tpu_custom_call.1} parent=39 // pred_check
          %p301 = pneg %p40
        $region42: #{tpu_custom_call.1} parent=39 // pred_check_branch
          %303 = sbr.rel (%p301) target = $region44
        $region43: #{tpu_custom_call.1} parent=39 // pred_region
          %s304 = smul.u32 4, %s20
          %s305 = ssub.s32 13, %s304
          %p306 = scmp.lt.s32.totalorder %s305, 4
          %s307 = scalar_select %p306, %s305, 4
          %s308 = smul.u32 128, %s307
          %p309 = scmp.lt.s32.totalorder %s304, 12
          %s310 = scalar_select %p309, %s304, 12
          %s311 = smul.addr %s310, 8
          %s312 = scalar_lea.vmem %s0, %s311
          %s313 = smul.u32 4, %s20
          %s314 = ssub.s32 13, %s313
          %p315 = scmp.lt.s32.totalorder %s314, 4
          %s316 = scalar_select %p315, %s314, 4
          %s317 = smul.u32 128, %s316
        $region44: #{tpu_custom_call.1} parent=39 // pred_fallthru
          _
        // Predicated region
        $region45: #{tpu_custom_call.1} parent=39 // pred_check
          %p318 = pneg %p66
        $region46: #{tpu_custom_call.1} parent=39 // pred_check_branch
          %320 = sbr.rel (%p318) target = $region48
        $region47: #{tpu_custom_call.1} parent=39 // pred_region
          %s321 = smul.u32 4, %s20
          %s322 = ssub.s32 13, %s321
          %p323 = scmp.lt.s32.totalorder %s322, 4
          %s324 = scalar_select %p323, %s322, 4
          %s325 = smul.u32 128, %s324
          %p326 = scmp.lt.s32.totalorder %s321, 12
          %s327 = scalar_select %p326, %s321, 12
          %s328 = smul.addr %s327, 8
          %s329 = scalar_lea.vmem %s1, %s328
          %s330 = smul.u32 4, %s20
          %s331 = ssub.s32 13, %s330
          %p332 = scmp.lt.s32.totalorder %s331, 4
          %s333 = scalar_select %p332, %s331, 4
          %s334 = smul.u32 128, %s333
        $region48: #{tpu_custom_call.1} parent=39 // pred_fallthru
          _
      $region40: #{tpu_custom_call.1} parent=5 // pred_fallthru
        _
      %p335 = scmp.le.s32.totalorder 1, %s20
      %p336 = scmp.lt.s32.totalorder %s20, 5
      %p337 = pnand %p335, %p336
      %p338 = pneg %p337
      // Predicated region
      $region49: #{tpu_custom_call.1} parent=5 // pred_check
        _
      $region50: #{tpu_custom_call.1} parent=5 // pred_check_branch
        %340 = sbr.rel (%p337) target = $region52
      $region51: #{tpu_custom_call.1} parent=5 // pred_region
        %s341 = ssub.s32 %s20, 1
        // Predicated region
        $region53: #{tpu_custom_call.1} parent=51 // pred_check
          %p342 = pneg %p93
        $region54: #{tpu_custom_call.1} parent=51 // pred_check_branch
          %344 = sbr.rel (%p342) target = $region56
        $region55: #{tpu_custom_call.1} parent=51 // pred_region
          %345 = dma.done [#allocation3], 2048
        $region56: #{tpu_custom_call.1} parent=51 // pred_fallthru
          _
        // Predicated region
        $region57: #{tpu_custom_call.1} parent=51 // pred_check
          %p346 = pneg %p114
        $region58: #{tpu_custom_call.1} parent=51 // pred_check_branch
          %348 = sbr.rel (%p346) target = $region60
        $region59: #{tpu_custom_call.1} parent=51 // pred_region
          %349 = dma.done [#allocation6], 2048
        $region60: #{tpu_custom_call.1} parent=51 // pred_fallthru
          _
        // Predicated region
        $region61: #{tpu_custom_call.1} parent=51 // pred_check
          %p350 = pneg %p135
        $region62: #{tpu_custom_call.1} parent=51 // pred_check_branch
          %352 = sbr.rel (%p350) target = $region64
        $region63: #{tpu_custom_call.1} parent=51 // pred_region
          %353 = dma.done [#allocation6], 2048
        $region64: #{tpu_custom_call.1} parent=51 // pred_fallthru
          _
        // Predicated region
        $region65: #{tpu_custom_call.1} parent=51 // pred_check
          %p354 = pneg %p156
        $region66: #{tpu_custom_call.1} parent=51 // pred_check_branch
          %356 = sbr.rel (%p354) target = $region68
        $region67: #{tpu_custom_call.1} parent=51 // pred_region
          %357 = dma.done [#allocation9], 2048
        $region68: #{tpu_custom_call.1} parent=51 // pred_fallthru
          _
        %s358 = smul.u32 4, %s25
        %s359 = ssub.s32 13, %s358
        %p360 = scmp.lt.s32.totalorder %s359, 4
        %s361 = scalar_select %p360, %s359, 4
        %s362 = smul.u32 128, %s361
        %p363 = scmp.lt.s32.totalorder %s358, 12
        %s364 = scalar_select %p363, %s358, 12
        %s365 = smul.addr %s364, 8
        %s366 = scalar_lea.vmem %s0, %s365
        %p367 = pneg %p46
        %p368 = pneg %p43
        %s369 = smul.u32 4, %s25
        %s370 = ssub.s32 13, %s369
        %p371 = scmp.lt.s32.totalorder %s370, 4
        %s372 = scalar_select %p371, %s370, 4
        %s373 = smul.u32 128, %s372
        %p374 = scmp.lt.s32.totalorder %s369, 12
        %s375 = scalar_select %p374, %s369, 12
        %s376 = smul.addr %s375, 8
        %s377 = scalar_lea.vmem %s1, %s376
        %p378 = pneg %p72
        %p379 = pneg %p69
        %p380 = pneg %p93
        %p381 = pneg %p90
        %p382 = pneg %p114
        %p383 = pneg %p111
        %p384 = pneg %p135
        %p385 = pneg %p132
        %p386 = pneg %p156
        %p387 = pneg %p153
        %p388 = pneg %p177
        %p389 = pneg %p174
        %p390 = pneg %p198
        %p391 = pneg %p195
        %p392 = pneg %p224
        %p393 = pneg %p221
        %s394 = sand.u32 %s211, 1
        %s395 = scalar_lea.sflag [#allocation4], %s394
        %s396 = sand.u32 %s211, 1
        %s397 = smul.addr %s396, 32
        %s398 = scalar_lea.vmem [#allocation10], %s397
        %s399 = smul.u32 4, %s25
        %s400 = ssub.s32 13, %s399
        %p401 = scmp.lt.s32.totalorder %s400, 4
        %s402 = scalar_select %p401, %s400, 4
        %s403 = smul.u32 128, %s402
        %p404 = scmp.lt.s32.totalorder %s399, 12
        %s405 = scalar_select %p404, %s399, 12
        %s406 = smul.addr %s405, 8
        %s407 = scalar_lea.vmem %s0, %s406
        %s408 = smul.u32 4, %s25
        %s409 = ssub.s32 13, %s408
        %p410 = scmp.lt.s32.totalorder %s409, 4
        %s411 = scalar_select %p410, %s409, 4
        %s412 = smul.u32 128, %s411
        %s413 = smul.u32 4, %s25
        %s414 = ssub.s32 13, %s413
        %p415 = scmp.lt.s32.totalorder %s414, 4
        %s416 = scalar_select %p415, %s414, 4
        %s417 = smul.u32 128, %s416
        %p418 = scmp.lt.s32.totalorder %s413, 12
        %s419 = scalar_select %p418, %s413, 12
        %s420 = smul.addr %s419, 8
        %s421 = scalar_lea.vmem %s1, %s420
        %s422 = smul.u32 4, %s25
        %s423 = ssub.s32 13, %s422
        %p424 = scmp.lt.s32.totalorder %s423, 4
        %s425 = scalar_select %p424, %s423, 4
        %s426 = smul.u32 128, %s425
        %s427 = smul.u32 4, %s25
        %s428 = ssub.s32 13, %s427
        %p429 = scmp.lt.s32.totalorder %s428, 4
        %s430 = scalar_select %p429, %s428, 4
        %s431 = smul.u32 128, %s430
        %v432 = vld [vmem:[%s407] sm:$0xff]
        %v433 = vld [vmem:[%s407 + $0x8] sm:$0xff]
        %v434 = vld [vmem:[%s407 + $0x10] sm:$0xff]
        %v435 = vld [vmem:[%s407 + $0x18] sm:$0xff]
        %v436 = vlaneseq
        %v437 = vand.u32 %v436, 127
        %v438 = vld [vmem:[%s421] sm:$0xff]
        %v439 = vld [vmem:[%s421 + $0x8] sm:$0xff]
        %v440 = vld [vmem:[%s421 + $0x10] sm:$0xff]
        %v441 = vld [vmem:[%s421 + $0x18] sm:$0xff]
        %vm442 = vcmp.ge.s32.totalorder %v437, 29
        %v443 = vsub.s32 %v437, 29
        %v444 = vsel %vm442, %v443, %v437
        %445 = vset.pattern.permute.xlu0 1
        %446 = vperm.xlu0 %445, %v438
        %v447 = vpop.permute.xlu0 %446
        %448 = vset.pattern.permute.xlu0 1
        %449 = vperm.xlu0 %448, %v439
        %v450 = vpop.permute.xlu0 %449
        %451 = vset.pattern.permute.xlu0 1
        %452 = vperm.xlu0 %451, %v440
        %v453 = vpop.permute.xlu0 %452
        %454 = vset.pattern.permute.xlu0 1
        %455 = vperm.xlu0 %454, %v441
        %v456 = vpop.permute.xlu0 %455
        %457 = vset.pattern.permute.xlu0 0
        %458 = vperm.xlu0 %457, %v438
        %v459 = vpop.permute.xlu0 %458
        %460 = vset.pattern.permute.xlu0 0
        %461 = vperm.xlu0 %460, %v439
        %v462 = vpop.permute.xlu0 %461
        %463 = vset.pattern.permute.xlu0 0
        %464 = vperm.xlu0 %463, %v440
        %v465 = vpop.permute.xlu0 %464
        %466 = vset.pattern.permute.xlu0 0
        %467 = vperm.xlu0 %466, %v441
        %v468 = vpop.permute.xlu0 %467
        %v469 = vsel %vm442, %v447, %v459
        %v470 = vsel %vm442, %v450, %v462
        %v471 = vsel %vm442, %v453, %v465
        %v472 = vsel %vm442, %v456, %v468
        %vm473 = vcmp.eq.s32.totalorder %v444, %v469
        %vm474 = vcmp.eq.s32.totalorder %v444, %v470
        %vm475 = vcmp.eq.s32.totalorder %v444, %v471
        %vm476 = vcmp.eq.s32.totalorder %v444, %v472
        %v477 = vsel %vm473, 1, 0
        %v478 = vsel %vm474, 1, 0
        %v479 = vsel %vm475, 1, 0
        %v480 = vsel %vm476, 1, 0
        %v481 = vcvt.s32.f32 %v477
        %v482 = vcvt.s32.f32 %v478
        %v483 = vcvt.s32.f32 %v479
        %v484 = vcvt.s32.f32 %v480
        %v485 = vld [vmem:[#allocation8] sm:$0xff]
        %v486 = vld [vmem:[#allocation8 + $0x8] sm:$0xff]
        %v487 = vld [vmem:[#allocation8 + $0x10] sm:$0xff]
        %v488 = vld [vmem:[#allocation8 + $0x18] sm:$0xff]
        %v489 = vld [vmem:[#allocation8 + $0x20] sm:$0xff]
        %v490 = vld [vmem:[#allocation8 + $0x28] sm:$0xff]
        %v491 = vld [vmem:[#allocation8 + $0x30] sm:$0xff]
        %v492 = vld [vmem:[#allocation8 + $0x38] sm:$0xff]
        %v493 = vld [vmem:[#allocation8 + $0x40] sm:$0xff]
        %v494 = vld [vmem:[#allocation8 + $0x48] sm:$0xff]
        %v495 = vld [vmem:[#allocation8 + $0x50] sm:$0xff]
        %v496 = vld [vmem:[#allocation8 + $0x58] sm:$0xff]
        %v497 = vld [vmem:[#allocation8 + $0x60] sm:$0xff]
        %v498 = vld [vmem:[#allocation8 + $0x68] sm:$0xff]
        %v499 = vld [vmem:[#allocation8 + $0x70] sm:$0x3]
        %v500 = vld [vmem:[#allocation8 + $0x78] sm:$0x3]
        %v501 = vld [vmem:[%s6] sm:$0x3]
        %v503 = vlaneseq
        %v504 = vshrl.u32 %v503, 7
        %v505 = vsub.s32 0, %v504
        %v506 = vrot.slane %v501, %v505
        %v507 = vlaneseq
        %v508 = vshrl.u32 %v507, 7
        %v509 = vsub.s32 1, %v508
        %v510 = vrot.slane %v501, %v509
        %vm513 = vcmask 474112
        %v515 = vsel %vm513, %v481, 0
        %v518 = vsel %vm513, %v482, 0
        %v521 = vsel %vm513, %v483, 0
        %v524 = vsel %vm513, %v484, 0
        %vm526 = vcmask 1041408
        %v528 = vsel %vm526, %v499, 0
        %v531 = vsel %vm526, %v500, 0
        %533 = vmatprep.subr.mxu0 0.0
        %534 = vmatpush1.msra.mxu0 0.0
        %535 = vmatprep.subr.mxu0 0.0
        %536 = vmatpush1.msra.mxu0 0.0
        %537 = vmatprep.subr.mxu0 0.0
        %538 = vmatpush1.msra.mxu0 0.0
        %539 = vmatprep.subr.mxu0 0.0
        %540 = vmatpush1.msra.mxu0 0.0
        %541 = vmatprep.subr.mxu0 0.0
        %542 = vmatpush1.msra.mxu0 0.0
        %543 = vmatprep.subr.mxu0 0.0
        %544 = vmatpush1.msra.mxu0 0.0
        %545 = vmatprep.subr.mxu0 0.0
        %546 = vmatpush1.msra.mxu0 0.0
        %547 = vmatprep.subr.mxu0 0.0
        %548 = vmatpush1.msra.mxu0 0.0
        %549 = vmatprep.subr.mxu0 %v531
        %550 = vmatpush1.msra.mxu0 %v528
        %551 = vmatprep.subr.mxu0 %v498
        %552 = vmatpush1.msra.mxu0 %v497
        %553 = vmatprep.subr.mxu0 %v496
        %554 = vmatpush1.msra.mxu0 %v495
        %555 = vmatprep.subr.mxu0 %v494
        %556 = vmatpush1.msra.mxu0 %v493
        %557 = vmatprep.subr.mxu0 %v492
        %558 = vmatpush1.msra.mxu0 %v491
        %559 = vmatprep.subr.mxu0 %v490
        %560 = vmatpush1.msra.mxu0 %v489
        %561 = vmatprep.subr.mxu0 %v488
        %562 = vmatpush1.msra.mxu0 %v487
        %563 = vmatprep.subr.mxu0 %v486
        %564 = vmatpush1.msra.mxu0 %v485
        %565 = vmatprep.subr.mxu0 0.0
        %566 = vmatpush2.msra.mxu0 0.0
        %567 = vmatprep.subr.mxu0 0.0
        %568 = vmatpush2.msra.mxu0 0.0
        %569 = vmatprep.subr.mxu0 0.0
        %570 = vmatpush2.msra.mxu0 0.0
        %571 = vmatprep.subr.mxu0 0.0
        %572 = vmatpush2.msra.mxu0 0.0
        %573 = vmatprep.subr.mxu0 0.0
        %574 = vmatpush2.msra.mxu0 0.0
        %575 = vmatprep.subr.mxu0 0.0
        %576 = vmatpush2.msra.mxu0 0.0
        %577 = vmatprep.subr.mxu0 0.0
        %578 = vmatpush2.msra.mxu0 0.0
        %579 = vmatprep.subr.mxu0 0.0
        %580 = vmatpush2.msra.mxu0 0.0
        %581 = vmatprep.subr.mxu0 0.0
        %582 = vmatpush2.msra.mxu0 0.0
        %583 = vmatprep.subr.mxu0 0.0
        %584 = vmatpush2.msra.mxu0 0.0
        %585 = vmatprep.subr.mxu0 0.0
        %586 = vmatpush2.msra.mxu0 0.0
        %587 = vmatprep.subr.mxu0 0.0
        %588 = vmatpush2.msra.mxu0 0.0
        %589 = vmatprep.subr.mxu0 0.0
        %590 = vmatpush2.msra.mxu0 0.0
        %591 = vmatprep.subr.mxu0 0.0
        %592 = vmatpush2.msra.mxu0 0.0
        %593 = vmatprep.subr.mxu0 0.0
        %594 = vmatpush2.msra.mxu0 0.0
        %595 = vmatprep.subr.mxu0 0.0
        %596 = vmatpush2.msra.mxu0 0.0
        %597 = vmatprep.mubr.f32.mxu0 0.0
        %598 = vmatmul.mubr.f32.gmra.mxu0 %v515
        %v599 = vpop.f32.mrf.mxu0
        %v600 = vadd.f32 %v506, %v599
        %v601 = vpop.f32.mrf.mxu0
        %v602 = vadd.f32 %v510, %v601
        %603 = vmatprep.mubr.f32.mxu0 0.0
        %604 = vmatmul.mubr.f32.gmra.mxu0 %v518
        %v605 = vpop.f32.mrf.mxu0
        %v606 = vadd.f32 %v506, %v605
        %v607 = vpop.f32.mrf.mxu0
        %v608 = vadd.f32 %v510, %v607
        %609 = vmatprep.mubr.f32.mxu0 0.0
        %610 = vmatmul.mubr.f32.gmra.mxu0 %v521
        %v611 = vpop.f32.mrf.mxu0
        %v612 = vadd.f32 %v506, %v611
        %v613 = vpop.f32.mrf.mxu0
        %v614 = vadd.f32 %v510, %v613
        %615 = vmatprep.mubr.f32.mxu0 0.0
        %616 = vmatmul.mubr.f32.gmra.mxu0 %v524
        %v617 = vpop.f32.mrf.mxu0
        %v618 = vadd.f32 %v506, %v617
        %v619 = vpop.f32.mrf.mxu0
        %v620 = vadd.f32 %v510, %v619
        %621 = vdwg.mxu0
        %v622 = vmax.f32 %v432, 0.0
        %v623 = vmax.f32 %v433, 0.0
        %v624 = vmax.f32 %v434, 0.0
        %v625 = vmax.f32 %v435, 0.0
        %v626 = vld [vmem:[#allocation2] sm:$0xff]
        %v627 = vld [vmem:[#allocation2 + $0x8] sm:$0xff]
        %v628 = vld [vmem:[#allocation2 + $0x10] sm:$0xff]
        %v629 = vld [vmem:[#allocation2 + $0x18] sm:$0xff]
        %v630 = vld [vmem:[#allocation2 + $0x20] sm:$0xff]
        %v631 = vld [vmem:[#allocation2 + $0x28] sm:$0xff]
        %v632 = vld [vmem:[#allocation2 + $0x30] sm:$0xff]
        %v633 = vld [vmem:[#allocation2 + $0x38] sm:$0xff]
        %v634 = vld [vmem:[#allocation2 + $0x40] sm:$0xff]
        %v635 = vld [vmem:[#allocation2 + $0x48] sm:$0xff]
        %v636 = vld [vmem:[#allocation2 + $0x50] sm:$0xff]
        %v637 = vld [vmem:[#allocation2 + $0x58] sm:$0xff]
        %v638 = vld [vmem:[#allocation2 + $0x60] sm:$0xff]
        %v639 = vld [vmem:[#allocation2 + $0x68] sm:$0xff]
        %v640 = vld [vmem:[#allocation2 + $0x70] sm:$0xff]
        %v641 = vld [vmem:[#allocation2 + $0x78] sm:$0xff]
        %642 = vmatprep.subr.mxu0 0.0
        %643 = vmatpush1.msra.mxu0 %v641
        %644 = vmatprep.subr.mxu0 0.0
        %645 = vmatpush1.msra.mxu0 %v640
        %646 = vmatprep.subr.mxu0 0.0
        %647 = vmatpush1.msra.mxu0 %v639
        %648 = vmatprep.subr.mxu0 0.0
        %649 = vmatpush1.msra.mxu0 %v638
        %650 = vmatprep.subr.mxu0 0.0
        %651 = vmatpush1.msra.mxu0 %v637
        %652 = vmatprep.subr.mxu0 0.0
        %653 = vmatpush1.msra.mxu0 %v636
        %654 = vmatprep.subr.mxu0 0.0
        %655 = vmatpush1.msra.mxu0 %v635
        %656 = vmatprep.subr.mxu0 0.0
        %657 = vmatpush1.msra.mxu0 %v634
        %658 = vmatprep.subr.mxu0 0.0
        %659 = vmatpush1.msra.mxu0 %v633
        %660 = vmatprep.subr.mxu0 0.0
        %661 = vmatpush1.msra.mxu0 %v632
        %662 = vmatprep.subr.mxu0 0.0
        %663 = vmatpush1.msra.mxu0 %v631
        %664 = vmatprep.subr.mxu0 0.0
        %665 = vmatpush1.msra.mxu0 %v630
        %666 = vmatprep.subr.mxu0 0.0
        %667 = vmatpush1.msra.mxu0 %v629
        %668 = vmatprep.subr.mxu0 0.0
        %669 = vmatpush1.msra.mxu0 %v628
        %670 = vmatprep.subr.mxu0 0.0
        %671 = vmatpush1.msra.mxu0 %v627
        %672 = vmatprep.subr.mxu0 0.0
        %673 = vmatpush1.msra.mxu0 %v626
        %674 = vmatprep.subr.mxu0 0.0
        %675 = vmatpush2.msra.mxu0 0.0
        %676 = vmatprep.subr.mxu0 0.0
        %677 = vmatpush2.msra.mxu0 0.0
        %678 = vmatprep.subr.mxu0 0.0
        %679 = vmatpush2.msra.mxu0 0.0
        %680 = vmatprep.subr.mxu0 0.0
        %681 = vmatpush2.msra.mxu0 0.0
        %682 = vmatprep.subr.mxu0 0.0
        %683 = vmatpush2.msra.mxu0 0.0
        %684 = vmatprep.subr.mxu0 0.0
        %685 = vmatpush2.msra.mxu0 0.0
        %686 = vmatprep.subr.mxu0 0.0
        %687 = vmatpush2.msra.mxu0 0.0
        %688 = vmatprep.subr.mxu0 0.0
        %689 = vmatpush2.msra.mxu0 0.0
        %690 = vmatprep.subr.mxu0 0.0
        %691 = vmatpush2.msra.mxu0 0.0
        %692 = vmatprep.subr.mxu0 0.0
        %693 = vmatpush2.msra.mxu0 0.0
        %694 = vmatprep.subr.mxu0 0.0
        %695 = vmatpush2.msra.mxu0 0.0
        %696 = vmatprep.subr.mxu0 0.0
        %697 = vmatpush2.msra.mxu0 0.0
        %698 = vmatprep.subr.mxu0 0.0
        %699 = vmatpush2.msra.mxu0 0.0
        %700 = vmatprep.subr.mxu0 0.0
        %701 = vmatpush2.msra.mxu0 0.0
        %702 = vmatprep.subr.mxu0 0.0
        %703 = vmatpush2.msra.mxu0 0.0
        %704 = vmatprep.subr.mxu0 0.0
        %705 = vmatpush2.msra.mxu0 0.0
        %706 = vmatprep.mubr.f32.mxu0 0.0
        %707 = vmatmul.mubr.f32.gmra.mxu0 %v622
        %v708 = vpop.f32.mrf.mxu0
        %v709 = vadd.f32 %v600, %v708
        %v710 = vpop.f32.mrf.mxu0
        %711 = vmatprep.mubr.f32.mxu0 0.0
        %712 = vmatmul.mubr.f32.gmra.mxu0 %v623
        %v713 = vpop.f32.mrf.mxu0
        %v714 = vadd.f32 %v606, %v713
        %v715 = vpop.f32.mrf.mxu0
        %716 = vmatprep.mubr.f32.mxu0 0.0
        %717 = vmatmul.mubr.f32.gmra.mxu0 %v624
        %v718 = vpop.f32.mrf.mxu0
        %v719 = vadd.f32 %v612, %v718
        %v720 = vpop.f32.mrf.mxu0
        %721 = vmatprep.mubr.f32.mxu0 0.0
        %722 = vmatmul.mubr.f32.gmra.mxu0 %v625
        %v723 = vpop.f32.mrf.mxu0
        %v724 = vadd.f32 %v618, %v723
        %v725 = vpop.f32.mrf.mxu0
        %726 = vdwg.mxu0
        %v727 = vmax.f32 %v709, 0.0
        %v728 = vmax.f32 %v714, 0.0
        %v729 = vmax.f32 %v719, 0.0
        %v730 = vmax.f32 %v724, 0.0
        %v731 = vld [vmem:[#allocation5] sm:$0xff]
        %v732 = vld [vmem:[#allocation5 + $0x8] sm:$0xff]
        %v733 = vld [vmem:[#allocation5 + $0x10] sm:$0xff]
        %v734 = vld [vmem:[#allocation5 + $0x18] sm:$0xff]
        %v735 = vld [vmem:[#allocation5 + $0x20] sm:$0xff]
        %v736 = vld [vmem:[#allocation5 + $0x28] sm:$0xff]
        %v737 = vld [vmem:[#allocation5 + $0x30] sm:$0xff]
        %v738 = vld [vmem:[#allocation5 + $0x38] sm:$0xff]
        %v739 = vld [vmem:[#allocation5 + $0x40] sm:$0xff]
        %v740 = vld [vmem:[#allocation5 + $0x48] sm:$0xff]
        %v741 = vld [vmem:[#allocation5 + $0x50] sm:$0xff]
        %v742 = vld [vmem:[#allocation5 + $0x58] sm:$0xff]
        %v743 = vld [vmem:[#allocation5 + $0x60] sm:$0xff]
        %v744 = vld [vmem:[#allocation5 + $0x68] sm:$0xff]
        %v745 = vld [vmem:[#allocation5 + $0x70] sm:$0xff]
        %v746 = vld [vmem:[#allocation5 + $0x78] sm:$0xff]
        %747 = vmatprep.subr.mxu0 0.0
        %748 = vmatpush1.msra.mxu0 %v746
        %749 = vmatprep.subr.mxu0 0.0
        %750 = vmatpush1.msra.mxu0 %v745
        %751 = vmatprep.subr.mxu0 0.0
        %752 = vmatpush1.msra.mxu0 %v744
        %753 = vmatprep.subr.mxu0 0.0
        %754 = vmatpush1.msra.mxu0 %v743
        %755 = vmatprep.subr.mxu0 0.0
        %756 = vmatpush1.msra.mxu0 %v742
        %757 = vmatprep.subr.mxu0 0.0
        %758 = vmatpush1.msra.mxu0 %v741
        %759 = vmatprep.subr.mxu0 0.0
        %760 = vmatpush1.msra.mxu0 %v740
        %761 = vmatprep.subr.mxu0 0.0
        %762 = vmatpush1.msra.mxu0 %v739
        %763 = vmatprep.subr.mxu0 0.0
        %764 = vmatpush1.msra.mxu0 %v738
        %765 = vmatprep.subr.mxu0 0.0
        %766 = vmatpush1.msra.mxu0 %v737
        %767 = vmatprep.subr.mxu0 0.0
        %768 = vmatpush1.msra.mxu0 %v736
        %769 = vmatprep.subr.mxu0 0.0
        %770 = vmatpush1.msra.mxu0 %v735
        %771 = vmatprep.subr.mxu0 0.0
        %772 = vmatpush1.msra.mxu0 %v734
        %773 = vmatprep.subr.mxu0 0.0
        %774 = vmatpush1.msra.mxu0 %v733
        %775 = vmatprep.subr.mxu0 0.0
        %776 = vmatpush1.msra.mxu0 %v732
        %777 = vmatprep.subr.mxu0 0.0
        %778 = vmatpush1.msra.mxu0 %v731
        %779 = vmatprep.subr.mxu0 0.0
        %780 = vmatpush2.msra.mxu0 0.0
        %781 = vmatprep.subr.mxu0 0.0
        %782 = vmatpush2.msra.mxu0 0.0
        %783 = vmatprep.subr.mxu0 0.0
        %784 = vmatpush2.msra.mxu0 0.0
        %785 = vmatprep.subr.mxu0 0.0
        %786 = vmatpush2.msra.mxu0 0.0
        %787 = vmatprep.subr.mxu0 0.0
        %788 = vmatpush2.msra.mxu0 0.0
        %789 = vmatprep.subr.mxu0 0.0
        %790 = vmatpush2.msra.mxu0 0.0
        %791 = vmatprep.subr.mxu0 0.0
        %792 = vmatpush2.msra.mxu0 0.0
        %793 = vmatprep.subr.mxu0 0.0
        %794 = vmatpush2.msra.mxu0 0.0
        %795 = vmatprep.subr.mxu0 0.0
        %796 = vmatpush2.msra.mxu0 0.0
        %797 = vmatprep.subr.mxu0 0.0
        %798 = vmatpush2.msra.mxu0 0.0
        %799 = vmatprep.subr.mxu0 0.0
        %800 = vmatpush2.msra.mxu0 0.0
        %801 = vmatprep.subr.mxu0 0.0
        %802 = vmatpush2.msra.mxu0 0.0
        %803 = vmatprep.subr.mxu0 0.0
        %804 = vmatpush2.msra.mxu0 0.0
        %805 = vmatprep.subr.mxu0 0.0
        %806 = vmatpush2.msra.mxu0 0.0
        %807 = vmatprep.subr.mxu0 0.0
        %808 = vmatpush2.msra.mxu0 0.0
        %809 = vmatprep.subr.mxu0 0.0
        %810 = vmatpush2.msra.mxu0 0.0
        %811 = vmatprep.mubr.f32.mxu0 0.0
        %812 = vmatmul.mubr.f32.gmra.mxu0 %v727
        %v813 = vpop.f32.mrf.mxu0
        %v814 = vadd.f32 %v602, %v813
        %v815 = vpop.f32.mrf.mxu0
        %816 = vmatprep.mubr.f32.mxu0 0.0
        %817 = vmatmul.mubr.f32.gmra.mxu0 %v728
        %v818 = vpop.f32.mrf.mxu0
        %v819 = vadd.f32 %v608, %v818
        %v820 = vpop.f32.mrf.mxu0
        %821 = vmatprep.mubr.f32.mxu0 0.0
        %822 = vmatmul.mubr.f32.gmra.mxu0 %v729
        %v823 = vpop.f32.mrf.mxu0
        %v824 = vadd.f32 %v614, %v823
        %v825 = vpop.f32.mrf.mxu0
        %826 = vmatprep.mubr.f32.mxu0 0.0
        %827 = vmatmul.mubr.f32.gmra.mxu0 %v730
        %v828 = vpop.f32.mrf.mxu0
        %v829 = vadd.f32 %v620, %v828
        %v830 = vpop.f32.mrf.mxu0
        %831 = vdwg.mxu0
        %v832 = vmax.f32 %v814, 0.0
        %v833 = vmax.f32 %v819, 0.0
        %v834 = vmax.f32 %v824, 0.0
        %v835 = vmax.f32 %v829, 0.0
        %v836 = vadd.f32 %v832, %v432
        %v837 = vadd.f32 %v833, %v433
        %v838 = vadd.f32 %v834, %v434
        %v839 = vadd.f32 %v835, %v435
        %v840 = vld [vmem:[#allocation7] sm:$0xff]
        %v841 = vld [vmem:[#allocation7 + $0x8] sm:$0xff]
        %v842 = vld [vmem:[#allocation7 + $0x10] sm:$0xff]
        %v843 = vld [vmem:[#allocation7 + $0x18] sm:$0xff]
        %v844 = vld [vmem:[#allocation7 + $0x20] sm:$0xff]
        %v845 = vld [vmem:[#allocation7 + $0x28] sm:$0xff]
        %v846 = vld [vmem:[#allocation7 + $0x30] sm:$0xff]
        %v847 = vld [vmem:[#allocation7 + $0x38] sm:$0xff]
        %v848 = vld [vmem:[#allocation7 + $0x40] sm:$0xff]
        %v849 = vld [vmem:[#allocation7 + $0x48] sm:$0xff]
        %v850 = vld [vmem:[#allocation7 + $0x50] sm:$0xff]
        %v851 = vld [vmem:[#allocation7 + $0x58] sm:$0xff]
        %v852 = vld [vmem:[#allocation7 + $0x60] sm:$0xff]
        %v853 = vld [vmem:[#allocation7 + $0x68] sm:$0xff]
        %v854 = vld [vmem:[#allocation7 + $0x70] sm:$0xff]
        %v855 = vld [vmem:[#allocation7 + $0x78] sm:$0xff]
        %v856 = vld [vmem:[%s7] sm:$0x1]
        %v858 = vlaneseq
        %v859 = vshrl.u32 %v858, 7
        %v860 = vsub.s32 0, %v859
        %v861 = vrot.slane %v856, %v860
        %863 = vmatprep.subr.mxu0 0.0
        %864 = vmatpush1.msra.mxu0 %v855
        %865 = vmatprep.subr.mxu0 0.0
        %866 = vmatpush1.msra.mxu0 %v854
        %867 = vmatprep.subr.mxu0 0.0
        %868 = vmatpush1.msra.mxu0 %v853
        %869 = vmatprep.subr.mxu0 0.0
        %870 = vmatpush1.msra.mxu0 %v852
        %871 = vmatprep.subr.mxu0 0.0
        %872 = vmatpush1.msra.mxu0 %v851
        %873 = vmatprep.subr.mxu0 0.0
        %874 = vmatpush1.msra.mxu0 %v850
        %875 = vmatprep.subr.mxu0 0.0
        %876 = vmatpush1.msra.mxu0 %v849
        %877 = vmatprep.subr.mxu0 0.0
        %878 = vmatpush1.msra.mxu0 %v848
        %879 = vmatprep.subr.mxu0 0.0
        %880 = vmatpush1.msra.mxu0 %v847
        %881 = vmatprep.subr.mxu0 0.0
        %882 = vmatpush1.msra.mxu0 %v846
        %883 = vmatprep.subr.mxu0 0.0
        %884 = vmatpush1.msra.mxu0 %v845
        %885 = vmatprep.subr.mxu0 0.0
        %886 = vmatpush1.msra.mxu0 %v844
        %887 = vmatprep.subr.mxu0 0.0
        %888 = vmatpush1.msra.mxu0 %v843
        %889 = vmatprep.subr.mxu0 0.0
        %890 = vmatpush1.msra.mxu0 %v842
        %891 = vmatprep.subr.mxu0 0.0
        %892 = vmatpush1.msra.mxu0 %v841
        %893 = vmatprep.subr.mxu0 0.0
        %894 = vmatpush1.msra.mxu0 %v840
        %895 = vmatprep.subr.mxu0 0.0
        %896 = vmatpush2.msra.mxu0 0.0
        %897 = vmatprep.subr.mxu0 0.0
        %898 = vmatpush2.msra.mxu0 0.0
        %899 = vmatprep.subr.mxu0 0.0
        %900 = vmatpush2.msra.mxu0 0.0
        %901 = vmatprep.subr.mxu0 0.0
        %902 = vmatpush2.msra.mxu0 0.0
        %903 = vmatprep.subr.mxu0 0.0
        %904 = vmatpush2.msra.mxu0 0.0
        %905 = vmatprep.subr.mxu0 0.0
        %906 = vmatpush2.msra.mxu0 0.0
        %907 = vmatprep.subr.mxu0 0.0
        %908 = vmatpush2.msra.mxu0 0.0
        %909 = vmatprep.subr.mxu0 0.0
        %910 = vmatpush2.msra.mxu0 0.0
        %911 = vmatprep.subr.mxu0 0.0
        %912 = vmatpush2.msra.mxu0 0.0
        %913 = vmatprep.subr.mxu0 0.0
        %914 = vmatpush2.msra.mxu0 0.0
        %915 = vmatprep.subr.mxu0 0.0
        %916 = vmatpush2.msra.mxu0 0.0
        %917 = vmatprep.subr.mxu0 0.0
        %918 = vmatpush2.msra.mxu0 0.0
        %919 = vmatprep.subr.mxu0 0.0
        %920 = vmatpush2.msra.mxu0 0.0
        %921 = vmatprep.subr.mxu0 0.0
        %922 = vmatpush2.msra.mxu0 0.0
        %923 = vmatprep.subr.mxu0 0.0
        %924 = vmatpush2.msra.mxu0 0.0
        %925 = vmatprep.subr.mxu0 0.0
        %926 = vmatpush2.msra.mxu0 0.0
        %927 = vmatprep.mubr.f32.mxu0 0.0
        %928 = vmatmul.mubr.f32.gmra.mxu0 %v836
        %v929 = vpop.f32.mrf.mxu0
        %v930 = vadd.f32 %v861, %v929
        %v931 = vpop.f32.mrf.mxu0
        %932 = vmatprep.mubr.f32.mxu0 0.0
        %933 = vmatmul.mubr.f32.gmra.mxu0 %v837
        %v934 = vpop.f32.mrf.mxu0
        %v935 = vadd.f32 %v861, %v934
        %v936 = vpop.f32.mrf.mxu0
        %937 = vmatprep.mubr.f32.mxu0 0.0
        %938 = vmatmul.mubr.f32.gmra.mxu0 %v838
        %v939 = vpop.f32.mrf.mxu0
        %v940 = vadd.f32 %v861, %v939
        %v941 = vpop.f32.mrf.mxu0
        %942 = vmatprep.mubr.f32.mxu0 0.0
        %943 = vmatmul.mubr.f32.gmra.mxu0 %v839
        %v944 = vpop.f32.mrf.mxu0
        %v945 = vadd.f32 %v861, %v944
        %v946 = vpop.f32.mrf.mxu0
        %947 = vdwg.mxu0
        %948 = vst [vmem:[%s398] sm:$0xff] %v930
        %949 = vst [vmem:[%s398 + $0x8] sm:$0xff] %v935
        %950 = vst [vmem:[%s398 + $0x10] sm:$0xff] %v940
        %951 = vst [vmem:[%s398 + $0x18] sm:$0xff] %v945
        %s952 = sand.u32 %s211, 1
        %s953 = scalar_lea.sflag [#allocation4], %s952
        %s954 = sand.u32 %s211, 1
        %s955 = smul.addr %s954, 32
        %s956 = scalar_lea.vmem [#allocation10], %s955
        // Predicated region
        $region69: #{tpu_custom_call.1} parent=51 // pred_check
          %p957 = pneg %p221
        $region70: #{tpu_custom_call.1} parent=51 // pred_check_branch
          %959 = sbr.rel (%p957) target = $region72
        $region71: #{tpu_custom_call.1} parent=51 // pred_region
          %s960 = smul.u32 4, %s25
          %s961 = ssub.s32 13, %s960
          %p962 = scmp.lt.s32.totalorder %s961, 4
          %s963 = scalar_select %p962, %s961, 4
          %s964 = smul.u32 128, %s963
          %s966 = ssub.s32 512, %s964
          %967 = vsyncadd %s953, %s966
          %p968 = scmp.ne.s32.totalorder 0, %s964
          %s969 = smul.addr %s960, 128
          %s970 = scalar_lea.hbm %s8, %s969
          %s971 = smul.u32 8, %s963
          %s972 = sshll.u32 %s956, 4
          %s973 = int_to_ptr.vmem [resolvable:$true] %s972
          %s974 = sshll.u32 %s971, 4
          %978 = dma.vmem_to_hbm [thread:$0]  (%p968), %s973, %s974, %s970, %s953, 128, 128, 8
        $region72: #{tpu_custom_call.1} parent=51 // pred_fallthru
          _
      $region52: #{tpu_custom_call.1} parent=5 // pred_fallthru
        _
      %p979 = scmp.le.s32.totalorder 2, %s20
      // Predicated region
      $region73: #{tpu_custom_call.1} parent=5 // pred_check
        %p980 = pneg %p979
      $region74: #{tpu_custom_call.1} parent=5 // pred_check_branch
        %982 = sbr.rel (%p980) target = $region76
      $region75: #{tpu_custom_call.1} parent=5 // pred_region
        %s983 = ssub.s32 %s20, 2
        // Predicated region
        $region77: #{tpu_custom_call.1} parent=75 // pred_check
          %p984 = pneg %p227
        $region78: #{tpu_custom_call.1} parent=75 // pred_check_branch
          %986 = sbr.rel (%p984) target = $region80
        $region79: #{tpu_custom_call.1} parent=75 // pred_region
          %s987 = sand.u32 %s212, 1
          %s988 = scalar_lea.sflag [#allocation4], %s987
          %s989 = sand.u32 %s212, 1
          %s990 = smul.addr %s989, 32
          %s991 = scalar_lea.vmem [#allocation10], %s990
          %992 = dma.done %s988, 512
        $region80: #{tpu_custom_call.1} parent=75 // pred_fallthru
          _
      $region76: #{tpu_custom_call.1} parent=5 // pred_fallthru
        _
    $region6: #{tpu_custom_call.1} parent=1 // loop_footer
      %s24 = sadd.s32 1, %s20
    $region7: #{tpu_custom_call.1} parent=1 // loop_footer_branch
      %19 = sbr.rel target = $region3
    $region8: #{tpu_custom_call.1} parent=1 // loop_exit
      _
    %993 = vsyncpa [#allocation3], 1
    %s994 = scalar_lea.sflag [#allocation3], 1
    %995 = vsyncpa %s994, 1
    %996 = vsyncpa [#allocation6], 1
    %997 = vsyncpa [#allocation9], 1
    %998 = vsyncpa [#allocation4], 1
    %s999 = scalar_lea.sflag [#allocation4], 1
    %1000 = vsyncpa %s999, 1

</llo_original>
